<compile_context>
chip_gen: v6e
topology: v6e:2x2x1
jax: 0.10.0
libtpu: 0.0.40
codegen_flags: <defaults>
</compile_context>

<pallas_src>
import functools

import jax
import jax.numpy as jnp
from jax import lax
from jax.experimental import pallas as pl
from jax.experimental.pallas import tpu as pltpu


def mlp_kernel(xT_ref, w_in_ref, b_in_ref, w_h_ref, b_h_ref, w_out_ref, b_out_ref,
               oT_ref, *, num_layers):
    tm = xT_ref.shape[1]            # lane tile (batch columns)
    dim_hidden = w_h_ref.shape[0]

    # Input layer: (H, In) @ (In, tm) -> (H, tm); bias is an (H, 1) column
    # (single use -> no need to pre-materialize the broadcast).
    h = jnp.dot(w_in_ref[...], xT_ref[...], preferred_element_type=jnp.float32)
    h = jnp.maximum(h + b_in_ref[...], 0.0)

    # Hidden layers (shared weights, matching the PyTorch list-multiplication
    # semantics). Hoist the loop-invariant weight load and the bias broadcast
    # out of the loop: JAX does not CSE broadcast_in_dim.
    w_h = w_h_ref[...]
    b_h = jnp.broadcast_to(b_h_ref[...], (dim_hidden, tm))

    def hidden(hh):
        hh = jnp.dot(w_h, hh, preferred_element_type=jnp.float32)
        return jnp.maximum(hh + b_h, 0.0)

    if num_layers <= 4:
        # Small static unroll; num_layers is a Python int.
        for _ in range(num_layers):
            h = hidden(h)
    else:
        # Bound vreg live ranges for deep stacks while keeping scheduler visibility.
        h = lax.fori_loop(0, num_layers, lambda _, hh: hidden(hh), h, unroll=True)

    # Output layer: (Out, H) @ (H, tm) -> (Out, tm); lane-dense store.
    out = jnp.dot(w_out_ref[...], h, preferred_element_type=jnp.float32) + b_out_ref[...]
    oT_ref[...] = out.astype(oT_ref.dtype)


def _round_up(x, m):
    return ((x + m - 1) // m) * m


def mlp_pallas(x, w_in, b_in, w_h, b_h, w_out, b_out, *, num_layers, tm=1024):
    """x: (N, input_dim) f32. Weights in PyTorch layout (out_feat, in_feat),
    biases (out_feat,). Returns (N, out_dims) f32."""
    N, input_dim = x.shape
    dim_hidden = w_in.shape[0]
    out_dims = w_out.shape[0]

    # Lane tile over the batch: big enough to amortize per-step overhead,
    # a multiple of 128 lanes, and capped so tiny batches don't balloon.
    tm_eff = min(_round_up(tm, 128), _round_up(max(N, 1), 128))
    # Keep >= 2 grid steps when there is enough work so the "parallel" axis
    # can be split across v7x's two TensorCores.
    if N >= 256 and _round_up(N, tm_eff) // tm_eff < 2:
        tm_eff = max(128, _round_up((N + 1) // 2, 128))
    Np = _round_up(N, tm_eff)

    # Transposed, zero-padded activations: (input_dim, Np), batch on lanes.
    # Padded columns produce garbage (relu(bias) chain) and are sliced off below.
    xT = jnp.pad(x, ((0, Np - N), (0, 0))).T
    b_in_c = b_in.reshape(dim_hidden, 1)
    b_h_c = b_h.reshape(dim_hidden, 1)
    b_out_c = b_out.reshape(out_dims, 1)

    kernel = functools.partial(mlp_kernel, num_layers=num_layers)

    outT = pl.pallas_call(
        kernel,
        out_shape=jax.ShapeDtypeStruct((out_dims, Np), jnp.float32),
        grid_spec=pltpu.PrefetchScalarGridSpec(
            num_scalar_prefetch=0,
            grid=(Np // tm_eff,),
            in_specs=[
                pl.BlockSpec((input_dim, tm_eff), lambda i: (0, i)),        # x^T tile
                pl.BlockSpec((dim_hidden, input_dim), lambda i: (0, 0)),    # W_in
                pl.BlockSpec((dim_hidden, 1), lambda i: (0, 0)),            # b_in
                pl.BlockSpec((dim_hidden, dim_hidden), lambda i: (0, 0)),   # W_hidden (shared)
                pl.BlockSpec((dim_hidden, 1), lambda i: (0, 0)),            # b_hidden (shared)
                pl.BlockSpec((out_dims, dim_hidden), lambda i: (0, 0)),     # W_out
                pl.BlockSpec((out_dims, 1), lambda i: (0, 0)),              # b_out
            ],
            out_specs=pl.BlockSpec((out_dims, tm_eff), lambda i: (0, i)),
        ),
        compiler_params=pltpu.CompilerParams(
            dimension_semantics=("parallel",),
            # Per-step footprint at tm=1024: double-buffered x (16 KB) + out
            # (64 KB) tiles, ~10 KB of weights, ~128 KB hidden intermediate.
            # Stated explicitly so the tiling stays valid on v7x (64 MiB VMEM).
            vmem_limit_bytes=32 * 1024 * 1024,
        ),
    )(xT, w_in, b_in_c, w_h, b_h_c, w_out, b_out_c)

    return outT[:, :N].T


def init_linear(key, fan_in, fan_out):
    """Deterministic PyTorch-style Linear init: U(-1/sqrt(fan_in), 1/sqrt(fan_in)).
    Weight returned in PyTorch layout (fan_out, fan_in)."""
    kw, kb = jax.random.split(key)
    bound = 1.0 / jnp.sqrt(jnp.float32(fan_in))
    w = jax.random.uniform(kw, (fan_out, fan_in), jnp.float32, -bound, bound)
    b = jax.random.uniform(kb, (fan_out,), jnp.float32, -bound, bound)
    return w, b


def mlp_reference(x, w_in, b_in, w_h, b_h, w_out, b_out, num_layers):
    h = jnp.maximum(x @ w_in.T + b_in, 0.0)
    for _ in range(num_layers):
        h = jnp.maximum(h @ w_h.T + b_h, 0.0)
    return h @ w_out.T + b_out


if __name__ == "__main__":
    # Small shapes consistent with the module: MLP(input_dim=4, dim_hidden=32,
    # num_layers=2, out_dims=16), batch N=8.
    input_dim, dim_hidden, num_layers, out_dims = 4, 32, 2, 16
    N = 8

    key = jax.random.PRNGKey(0)
    k_x, k_in, k_h, k_out = jax.random.split(key, 4)

    x = jax.random.normal(k_x, (N, input_dim), jnp.float32)
    w_in, b_in = init_linear(k_in, input_dim, dim_hidden)
    w_h, b_h = init_linear(k_h, dim_hidden, dim_hidden)   # shared hidden layer
    w_out, b_out = init_linear(k_out, dim_hidden, out_dims)

    out = mlp_pallas(x, w_in, b_in, w_h, b_h, w_out, b_out, num_layers=num_layers)
    out = jax.block_until_ready(out)

    ref = mlp_reference(x, w_in, b_in, w_h, b_h, w_out, b_out, num_layers)
    assert out.shape == (N, out_dims)
    assert jnp.allclose(out, ref, atol=1e-4, rtol=1e-4), float(jnp.max(jnp.abs(out - ref)))

    print("KERNEL_OK")
</pallas_src>

<mosaic_0001>
module attributes {stable_mosaic.version = 11 : i64} {
  func.func @mlp_kernel(%arg0: i32, %arg1: memref<4x128xf32, #tpu.memory_space<vmem>>, %arg2: memref<32x4xf32, #tpu.memory_space<vmem>>, %arg3: memref<32x1xf32, #tpu.memory_space<vmem>>, %arg4: memref<32x32xf32, #tpu.memory_space<vmem>>, %arg5: memref<32x1xf32, #tpu.memory_space<vmem>>, %arg6: memref<16x32xf32, #tpu.memory_space<vmem>>, %arg7: memref<16x1xf32, #tpu.memory_space<vmem>>, %arg8: memref<16x128xf32, #tpu.memory_space<vmem>>) attributes {dimension_semantics = [#tpu.dimension_semantics<parallel>], iteration_bounds = array<i64: 1>, scalar_prefetch = 0 : i64, scratch_operands = 0 : i64, tpu.core_type = #tpu.core_type<tc>, window_params = [{transform_indices = @transform_0, window_bounds = array<i64: 4, 128>}, {pipeline_mode = #tpu.pipeline_mode<synchronous>, transform_indices = @transform_1, window_bounds = array<i64: 32, 4>}, {pipeline_mode = #tpu.pipeline_mode<synchronous>, transform_indices = @transform_2, window_bounds = array<i64: 32, 1>}, {pipeline_mode = #tpu.pipeline_mode<synchronous>, transform_indices = @transform_3, window_bounds = array<i64: 32, 32>}, {pipeline_mode = #tpu.pipeline_mode<synchronous>, transform_indices = @transform_4, window_bounds = array<i64: 32, 1>}, {pipeline_mode = #tpu.pipeline_mode<synchronous>, transform_indices = @transform_5, window_bounds = array<i64: 16, 32>}, {pipeline_mode = #tpu.pipeline_mode<synchronous>, transform_indices = @transform_6, window_bounds = array<i64: 16, 1>}, {transform_indices = @transform_7, window_bounds = array<i64: 16, 128>}]} {
    %c0 = arith.constant 0 : index
    %c0_0 = arith.constant 0 : index
    %0 = vector.load %arg2[%c0, %c0_0] : memref<32x4xf32, #tpu.memory_space<vmem>>, vector<32x4xf32>
    %c0_1 = arith.constant 0 : index
    %c0_2 = arith.constant 0 : index
    %1 = vector.load %arg1[%c0_1, %c0_2] : memref<4x128xf32, #tpu.memory_space<vmem>>, vector<4x128xf32>
    %cst = arith.constant dense<0.000000e+00> : vector<32x128xf32>
    %2 = tpu.matmul %0, %1, %cst {dimension_numbers = #tpu.dot_dimension_numbers<[1], [0], [0], [1], [0, 0, 1, 1], [], []>} : vector<32x4xf32>, vector<4x128xf32>, vector<32x128xf32> -> vector<32x128xf32>
    %c0_3 = arith.constant 0 : index
    %c0_4 = arith.constant 0 : index
    %3 = vector.load %arg3[%c0_3, %c0_4] : memref<32x1xf32, #tpu.memory_space<vmem>>, vector<32x1xf32>
    %4 = vector.broadcast %3 : vector<32x1xf32> to vector<32x128xf32>
    %5 = arith.addf %2, %4 : vector<32x128xf32>
    %cst_5 = arith.constant 0.000000e+00 : f32
    %6 = vector.broadcast %cst_5 : f32 to vector<32x128xf32>
    %7 = arith.maximumf %5, %6 : vector<32x128xf32>
    %c0_6 = arith.constant 0 : index
    %c0_7 = arith.constant 0 : index
    %8 = vector.load %arg4[%c0_6, %c0_7] : memref<32x32xf32, #tpu.memory_space<vmem>>, vector<32x32xf32>
    %c0_8 = arith.constant 0 : index
    %c0_9 = arith.constant 0 : index
    %9 = vector.load %arg5[%c0_8, %c0_9] : memref<32x1xf32, #tpu.memory_space<vmem>>, vector<32x1xf32>
    %10 = vector.shape_cast %9 : vector<32x1xf32> to vector<32x1xf32>
    %11 = vector.broadcast %10 : vector<32x1xf32> to vector<32x128xf32>
    %cst_10 = arith.constant dense<0.000000e+00> : vector<32x128xf32>
    %12 = tpu.matmul %8, %7, %cst_10 {dimension_numbers = #tpu.dot_dimension_numbers<[1], [0], [0], [1], [0, 0, 1, 1], [], []>} : vector<32x32xf32>, vector<32x128xf32>, vector<32x128xf32> -> vector<32x128xf32>
    %13 = arith.addf %12, %11 : vector<32x128xf32>
    %cst_11 = arith.constant 0.000000e+00 : f32
    %14 = vector.broadcast %cst_11 : f32 to vector<32x128xf32>
    %15 = arith.maximumf %13, %14 : vector<32x128xf32>
    %cst_12 = arith.constant dense<0.000000e+00> : vector<32x128xf32>
    %16 = tpu.matmul %8, %15, %cst_12 {dimension_numbers = #tpu.dot_dimension_numbers<[1], [0], [0], [1], [0, 0, 1, 1], [], []>} : vector<32x32xf32>, vector<32x128xf32>, vector<32x128xf32> -> vector<32x128xf32>
    %17 = arith.addf %16, %11 : vector<32x128xf32>
    %cst_13 = arith.constant 0.000000e+00 : f32
    %18 = vector.broadcast %cst_13 : f32 to vector<32x128xf32>
    %19 = arith.maximumf %17, %18 : vector<32x128xf32>
    %c0_14 = arith.constant 0 : index
    %c0_15 = arith.constant 0 : index
    %20 = vector.load %arg6[%c0_14, %c0_15] : memref<16x32xf32, #tpu.memory_space<vmem>>, vector<16x32xf32>
    %cst_16 = arith.constant dense<0.000000e+00> : vector<16x128xf32>
    %21 = tpu.matmul %20, %19, %cst_16 {dimension_numbers = #tpu.dot_dimension_numbers<[1], [0], [0], [1], [0, 0, 1, 1], [], []>} : vector<16x32xf32>, vector<32x128xf32>, vector<16x128xf32> -> vector<16x128xf32>
    %c0_17 = arith.constant 0 : index
    %c0_18 = arith.constant 0 : index
    %22 = vector.load %arg7[%c0_17, %c0_18] : memref<16x1xf32, #tpu.memory_space<vmem>>, vector<16x1xf32>
    %23 = vector.broadcast %22 : vector<16x1xf32> to vector<16x128xf32>
    %24 = arith.addf %21, %23 : vector<16x128xf32>
    %c0_19 = arith.constant 0 : index
    %c0_20 = arith.constant 0 : index
    %25 = vector.load %arg8[%c0_19, %c0_20] : memref<16x128xf32, #tpu.memory_space<vmem>>, vector<16x128xf32>
    tpu.vector_store %arg8[%c0_19, %c0_20], %24 {strides = array<i32>} : memref<16x128xf32, #tpu.memory_space<vmem>>, vector<16x128xf32>,
    return
  }
  func.func @transform_0(%arg0: i32) -> (i32, i32) {
    %c0_i32 = arith.constant 0 : i32
    %c0_i32_0 = arith.constant 0 : i32
    return %c0_i32, %arg0 : i32, i32
  }
  func.func @transform_1(%arg0: i32) -> (i32, i32) {
    %c0_i32 = arith.constant 0 : i32
    %c0_i32_0 = arith.constant 0 : i32
    %c0_i32_1 = arith.constant 0 : i32
    return %c0_i32, %c0_i32_0 : i32, i32
  }
  func.func @transform_2(%arg0: i32) -> (i32, i32) {
    %c0_i32 = arith.constant 0 : i32
    %c0_i32_0 = arith.constant 0 : i32
    %c0_i32_1 = arith.constant 0 : i32
    return %c0_i32, %c0_i32_0 : i32, i32
  }
  func.func @transform_3(%arg0: i32) -> (i32, i32) {
    %c0_i32 = arith.constant 0 : i32
    %c0_i32_0 = arith.constant 0 : i32
    %c0_i32_1 = arith.constant 0 : i32
    return %c0_i32, %c0_i32_0 : i32, i32
  }
  func.func @transform_4(%arg0: i32) -> (i32, i32) {
    %c0_i32 = arith.constant 0 : i32
    %c0_i32_0 = arith.constant 0 : i32
    %c0_i32_1 = arith.constant 0 : i32
    return %c0_i32, %c0_i32_0 : i32, i32
  }
  func.func @transform_5(%arg0: i32) -> (i32, i32) {
    %c0_i32 = arith.constant 0 : i32
    %c0_i32_0 = arith.constant 0 : i32
    %c0_i32_1 = arith.constant 0 : i32
    return %c0_i32, %c0_i32_0 : i32, i32
  }
  func.func @transform_6(%arg0: i32) -> (i32, i32) {
    %c0_i32 = arith.constant 0 : i32
    %c0_i32_0 = arith.constant 0 : i32
    %c0_i32_1 = arith.constant 0 : i32
    return %c0_i32, %c0_i32_0 : i32, i32
  }
  func.func @transform_7(%arg0: i32) -> (i32, i32) {
    %c0_i32 = arith.constant 0 : i32
    %c0_i32_0 = arith.constant 0 : i32
    return %c0_i32, %arg0 : i32, i32
  }
}

</mosaic_0001>

<llo_original>
// kernel: tpu_custom_call.1
$region0: #{tpu_custom_call.1}
  #allocation0 [shape = 'u32[]', space=smem, size = 0x4, offset = 0x4, fixed_abs, tag = 'smem constant byte address 0x4 - core index']
  #allocation1 [shape = 'u32[144,128]{1,0:T(1,128)}', space=vmem, size = 0x12000, scoped, tag = 'internal scratch']
  %s0 = inlined_call_operand.vmem [shape: f32[4,128], index: 0, kind: input, shape index: {}]
  %s1 = inlined_call_operand.vmem [shape: f32[32,4], index: 1, kind: input, shape index: {}]
  %s2 = inlined_call_operand.vmem [shape: f32[32,1], index: 2, kind: input, shape index: {}]
  %s3 = inlined_call_operand.vmem [shape: f32[32,32], index: 3, kind: input, shape index: {}]
  %s4 = inlined_call_operand.vmem [shape: f32[32,1], index: 4, kind: input, shape index: {}]
  %s5 = inlined_call_operand.vmem [shape: f32[16,32], index: 5, kind: input, shape index: {}]
  %s6 = inlined_call_operand.vmem [shape: f32[16,1], index: 6, kind: input, shape index: {}]
  %s7 = inlined_call_operand.hbm [shape: f32[16,128], index: 7, kind: output, shape index: {}]
  %s8 = sld [smem:[#allocation0]]
  $region38: #{tpu_custom_call.1} parent=0
    _
  %s10 = ssub.s32 1, %s8
  %s11 = scalar_select 0, %s10, %s8
  $region1: #{tpu_custom_call.1} parent=0
    #allocation2 [shape = 'u8[8192]{0}', space=vmem, size = 0x2000, scoped, tag = 'output window, operand 0, single buffered']
    #allocation3 [shape = 's32[1]{0}', space=sflag, size = 0x4, scoped, tag = 'scoped memory for tpu_custom_call.1']
    %12 = vsyncpa [#allocation3], 0
    // Predicated region
    $region2: #{tpu_custom_call.1} parent=1 // pred_check
      _
    $region3: #{tpu_custom_call.1} parent=1 // pred_check_branch
      %14 = sbr.rel (0) target = $region5
    $region4: #{tpu_custom_call.1} parent=1 // pred_region
      _
    $region5: #{tpu_custom_call.1} parent=1 // pred_fallthru
      _
    // Predicated region
    $region6: #{tpu_custom_call.1} parent=1 // pred_check
      _
    $region7: #{tpu_custom_call.1} parent=1 // pred_check_branch
      %16 = sbr.rel (0) target = $region9
    $region8: #{tpu_custom_call.1} parent=1 // pred_region
      _
    $region9: #{tpu_custom_call.1} parent=1 // pred_fallthru
      _
    // Predicated region
    $region10: #{tpu_custom_call.1} parent=1 // pred_check
      _
    $region11: #{tpu_custom_call.1} parent=1 // pred_check_branch
      %18 = sbr.rel (0) target = $region13
    $region12: #{tpu_custom_call.1} parent=1 // pred_region
      _
    $region13: #{tpu_custom_call.1} parent=1 // pred_fallthru
      _
    // Predicated region
    $region14: #{tpu_custom_call.1} parent=1 // pred_check
      _
    $region15: #{tpu_custom_call.1} parent=1 // pred_check_branch
      %20 = sbr.rel (0) target = $region17
    $region16: #{tpu_custom_call.1} parent=1 // pred_region
      _
    $region17: #{tpu_custom_call.1} parent=1 // pred_fallthru
      _
    // Predicated region
    $region18: #{tpu_custom_call.1} parent=1 // pred_check
      _
    $region19: #{tpu_custom_call.1} parent=1 // pred_check_branch
      %22 = sbr.rel (0) target = $region21
    $region20: #{tpu_custom_call.1} parent=1 // pred_region
      _
    $region21: #{tpu_custom_call.1} parent=1 // pred_fallthru
      _
    // Predicated region
    $region22: #{tpu_custom_call.1} parent=1 // pred_check
      _
    $region23: #{tpu_custom_call.1} parent=1 // pred_check_branch
      %24 = sbr.rel (0) target = $region25
    $region24: #{tpu_custom_call.1} parent=1 // pred_region
      _
    $region25: #{tpu_custom_call.1} parent=1 // pred_fallthru
      _
    // Predicated region
    $region26: #{tpu_custom_call.1} parent=1 // pred_check
      _
    $region27: #{tpu_custom_call.1} parent=1 // pred_check_branch
      %26 = sbr.rel (0) target = $region29
    $region28: #{tpu_custom_call.1} parent=1 // pred_region
      _
    $region29: #{tpu_custom_call.1} parent=1 // pred_fallthru
      _
    %v27 = vld [vmem:[%s1] sm:$0xff]
    %v28 = vld [vmem:[%s1 + $0x8] sm:$0xff]
    %v29 = vld [vmem:[%s1 + $0x10] sm:$0xff]
    %v30 = vld [vmem:[%s1 + $0x18] sm:$0xff]
    %v31 = vld [vmem:[%s0] sm:$0xf]
    %v32 = vld [vmem:[%s2] sm:$0xff]
    %v33 = vld [vmem:[%s2 + $0x8] sm:$0xff]
    %v34 = vld [vmem:[%s2 + $0x10] sm:$0xff]
    %v35 = vld [vmem:[%s2 + $0x18] sm:$0xff]
    %37 = vset.pattern.permute.xlu0 0
    %38 = vperm.xlu0 %37, %v32
    %v39 = vpop.permute.xlu0 %38
    %42 = vset.pattern.permute.xlu0 0
    %43 = vperm.xlu0 %42, %v33
    %v44 = vpop.permute.xlu0 %43
    %47 = vset.pattern.permute.xlu0 0
    %48 = vperm.xlu0 %47, %v34
    %v49 = vpop.permute.xlu0 %48
    %52 = vset.pattern.permute.xlu0 0
    %53 = vperm.xlu0 %52, %v35
    %v54 = vpop.permute.xlu0 %53
    %vm56 = vcmask 31744
    %v58 = vsel %vm56, %v27, 0
    %v61 = vsel %vm56, %v28, 0
    %v64 = vsel %vm56, %v29, 0
    %v67 = vsel %vm56, %v30, 0
    %vm69 = vcmask 1043456
    %v71 = vsel %vm69, %v31, 0
    %73 = vmatprep.subr.mxu0 0.0
    %74 = vmatpush1.msra.mxu0 0.0
    %75 = vmatprep.subr.mxu0 0.0
    %76 = vmatpush1.msra.mxu0 0.0
    %77 = vmatprep.subr.mxu0 0.0
    %78 = vmatpush1.msra.mxu0 0.0
    %79 = vmatprep.subr.mxu0 0.0
    %80 = vmatpush1.msra.mxu0 0.0
    %81 = vmatprep.subr.mxu0 0.0
    %82 = vmatpush1.msra.mxu0 0.0
    %83 = vmatprep.subr.mxu0 0.0
    %84 = vmatpush1.msra.mxu0 0.0
    %85 = vmatprep.subr.mxu0 0.0
    %86 = vmatpush1.msra.mxu0 0.0
    %87 = vmatprep.subr.mxu0 0.0
    %88 = vmatpush1.msra.mxu0 0.0
    %89 = vmatprep.subr.mxu0 0.0
    %90 = vmatpush1.msra.mxu0 0.0
    %91 = vmatprep.subr.mxu0 0.0
    %92 = vmatpush1.msra.mxu0 0.0
    %93 = vmatprep.subr.mxu0 0.0
    %94 = vmatpush1.msra.mxu0 0.0
    %95 = vmatprep.subr.mxu0 0.0
    %96 = vmatpush1.msra.mxu0 0.0
    %97 = vmatprep.subr.mxu0 0.0
    %98 = vmatpush1.msra.mxu0 0.0
    %99 = vmatprep.subr.mxu0 0.0
    %100 = vmatpush1.msra.mxu0 0.0
    %101 = vmatprep.subr.mxu0 0.0
    %102 = vmatpush1.msra.mxu0 0.0
    %103 = vmatprep.subr.mxu0 0.0
    %104 = vmatpush1.msra.mxu0 %v71
    %105 = vmatprep.subr.mxu0 0.0
    %106 = vmatpush2.msra.mxu0 0.0
    %107 = vmatprep.subr.mxu0 0.0
    %108 = vmatpush2.msra.mxu0 0.0
    %109 = vmatprep.subr.mxu0 0.0
    %110 = vmatpush2.msra.mxu0 0.0
    %111 = vmatprep.subr.mxu0 0.0
    %112 = vmatpush2.msra.mxu0 0.0
    %113 = vmatprep.subr.mxu0 0.0
    %114 = vmatpush2.msra.mxu0 0.0
    %115 = vmatprep.subr.mxu0 0.0
    %116 = vmatpush2.msra.mxu0 0.0
    %117 = vmatprep.subr.mxu0 0.0
    %118 = vmatpush2.msra.mxu0 0.0
    %119 = vmatprep.subr.mxu0 0.0
    %120 = vmatpush2.msra.mxu0 0.0
    %121 = vmatprep.subr.mxu0 0.0
    %122 = vmatpush2.msra.mxu0 0.0
    %123 = vmatprep.subr.mxu0 0.0
    %124 = vmatpush2.msra.mxu0 0.0
    %125 = vmatprep.subr.mxu0 0.0
    %126 = vmatpush2.msra.mxu0 0.0
    %127 = vmatprep.subr.mxu0 0.0
    %128 = vmatpush2.msra.mxu0 0.0
    %129 = vmatprep.subr.mxu0 0.0
    %130 = vmatpush2.msra.mxu0 0.0
    %131 = vmatprep.subr.mxu0 0.0
    %132 = vmatpush2.msra.mxu0 0.0
    %133 = vmatprep.subr.mxu0 0.0
    %134 = vmatpush2.msra.mxu0 0.0
    %135 = vmatprep.subr.mxu0 0.0
    %136 = vmatpush2.msra.mxu0 0.0
    %137 = vmatprep.mubr.f32.mxu0 0.0
    %138 = vmatmul.mubr.f32.gmra.mxu0 %v58
    %v139 = vpop.f32.mrf.mxu0
    %v140 = vadd.f32 %v39, %v139
    %v141 = vpop.f32.mrf.mxu0
    %142 = vmatprep.mubr.f32.mxu0 0.0
    %143 = vmatmul.mubr.f32.gmra.mxu0 %v61
    %v144 = vpop.f32.mrf.mxu0
    %v145 = vadd.f32 %v44, %v144
    %v146 = vpop.f32.mrf.mxu0
    %147 = vmatprep.mubr.f32.mxu0 0.0
    %148 = vmatmul.mubr.f32.gmra.mxu0 %v64
    %v149 = vpop.f32.mrf.mxu0
    %v150 = vadd.f32 %v49, %v149
    %v151 = vpop.f32.mrf.mxu0
    %152 = vmatprep.mubr.f32.mxu0 0.0
    %153 = vmatmul.mubr.f32.gmra.mxu0 %v67
    %v154 = vpop.f32.mrf.mxu0
    %v155 = vadd.f32 %v54, %v154
    %v156 = vpop.f32.mrf.mxu0
    %157 = vdwg.mxu0
    %v158 = vmax.f32 %v140, 0.0
    %v159 = vmax.f32 %v145, 0.0
    %v160 = vmax.f32 %v150, 0.0
    %v161 = vmax.f32 %v155, 0.0
    %v162 = vld [vmem:[%s3] sm:$0xff]
    %v163 = vld [vmem:[%s3 + $0x8] sm:$0xff]
    %v164 = vld [vmem:[%s3 + $0x10] sm:$0xff]
    %v165 = vld [vmem:[%s3 + $0x18] sm:$0xff]
    %v166 = vld [vmem:[%s4] sm:$0xff]
    %v167 = vld [vmem:[%s4 + $0x8] sm:$0xff]
    %v168 = vld [vmem:[%s4 + $0x10] sm:$0xff]
    %v169 = vld [vmem:[%s4 + $0x18] sm:$0xff]
    %171 = vset.pattern.permute.xlu0 0
    %172 = vperm.xlu0 %171, %v166
    %v173 = vpop.permute.xlu0 %172
    %176 = vset.pattern.permute.xlu0 0
    %177 = vperm.xlu0 %176, %v167
    %v178 = vpop.permute.xlu0 %177
    %181 = vset.pattern.permute.xlu0 0
    %182 = vperm.xlu0 %181, %v168
    %v183 = vpop.permute.xlu0 %182
    %186 = vset.pattern.permute.xlu0 0
    %187 = vperm.xlu0 %186, %v169
    %v188 = vpop.permute.xlu0 %187
    %vm190 = vcmask 261120
    %v192 = vsel %vm190, %v162, 0
    %v195 = vsel %vm190, %v163, 0
    %v198 = vsel %vm190, %v164, 0
    %v201 = vsel %vm190, %v165, 0
    %203 = vmatprep.subr.mxu0 0.0
    %204 = vmatpush1.msra.mxu0 0.0
    %205 = vmatprep.subr.mxu0 0.0
    %206 = vmatpush1.msra.mxu0 0.0
    %207 = vmatprep.subr.mxu0 0.0
    %208 = vmatpush1.msra.mxu0 0.0
    %209 = vmatprep.subr.mxu0 0.0
    %210 = vmatpush1.msra.mxu0 0.0
    %211 = vmatprep.subr.mxu0 0.0
    %212 = vmatpush1.msra.mxu0 0.0
    %213 = vmatprep.subr.mxu0 0.0
    %214 = vmatpush1.msra.mxu0 0.0
    %215 = vmatprep.subr.mxu0 0.0
    %216 = vmatpush1.msra.mxu0 0.0
    %217 = vmatprep.subr.mxu0 0.0
    %218 = vmatpush1.msra.mxu0 0.0
    %219 = vmatprep.subr.mxu0 0.0
    %220 = vmatpush1.msra.mxu0 0.0
    %221 = vmatprep.subr.mxu0 0.0
    %222 = vmatpush1.msra.mxu0 0.0
    %223 = vmatprep.subr.mxu0 0.0
    %224 = vmatpush1.msra.mxu0 0.0
    %225 = vmatprep.subr.mxu0 0.0
    %226 = vmatpush1.msra.mxu0 0.0
    %227 = vmatprep.subr.mxu0 0.0
    %228 = vmatpush1.msra.mxu0 %v161
    %229 = vmatprep.subr.mxu0 0.0
    %230 = vmatpush1.msra.mxu0 %v160
    %231 = vmatprep.subr.mxu0 0.0
    %232 = vmatpush1.msra.mxu0 %v159
    %233 = vmatprep.subr.mxu0 0.0
    %234 = vmatpush1.msra.mxu0 %v158
    %235 = vmatprep.subr.mxu0 0.0
    %236 = vmatpush2.msra.mxu0 0.0
    %237 = vmatprep.subr.mxu0 0.0
    %238 = vmatpush2.msra.mxu0 0.0
    %239 = vmatprep.subr.mxu0 0.0
    %240 = vmatpush2.msra.mxu0 0.0
    %241 = vmatprep.subr.mxu0 0.0
    %242 = vmatpush2.msra.mxu0 0.0
    %243 = vmatprep.subr.mxu0 0.0
    %244 = vmatpush2.msra.mxu0 0.0
    %245 = vmatprep.subr.mxu0 0.0
    %246 = vmatpush2.msra.mxu0 0.0
    %247 = vmatprep.subr.mxu0 0.0
    %248 = vmatpush2.msra.mxu0 0.0
    %249 = vmatprep.subr.mxu0 0.0
    %250 = vmatpush2.msra.mxu0 0.0
    %251 = vmatprep.subr.mxu0 0.0
    %252 = vmatpush2.msra.mxu0 0.0
    %253 = vmatprep.subr.mxu0 0.0
    %254 = vmatpush2.msra.mxu0 0.0
    %255 = vmatprep.subr.mxu0 0.0
    %256 = vmatpush2.msra.mxu0 0.0
    %257 = vmatprep.subr.mxu0 0.0
    %258 = vmatpush2.msra.mxu0 0.0
    %259 = vmatprep.subr.mxu0 0.0
    %260 = vmatpush2.msra.mxu0 0.0
    %261 = vmatprep.subr.mxu0 0.0
    %262 = vmatpush2.msra.mxu0 0.0
    %263 = vmatprep.subr.mxu0 0.0
    %264 = vmatpush2.msra.mxu0 0.0
    %265 = vmatprep.subr.mxu0 0.0
    %266 = vmatpush2.msra.mxu0 0.0
    %267 = vmatprep.mubr.f32.mxu0 0.0
    %268 = vmatmul.mubr.f32.gmra.mxu0 %v192
    %v269 = vpop.f32.mrf.mxu0
    %v270 = vadd.f32 %v173, %v269
    %v271 = vpop.f32.mrf.mxu0
    %272 = vmatprep.mubr.f32.mxu0 0.0
    %273 = vmatmul.mubr.f32.gmra.mxu0 %v195
    %v274 = vpop.f32.mrf.mxu0
    %v275 = vadd.f32 %v178, %v274
    %v276 = vpop.f32.mrf.mxu0
    %277 = vmatprep.mubr.f32.mxu0 0.0
    %278 = vmatmul.mubr.f32.gmra.mxu0 %v198
    %v279 = vpop.f32.mrf.mxu0
    %v280 = vadd.f32 %v183, %v279
    %v281 = vpop.f32.mrf.mxu0
    %282 = vmatprep.mubr.f32.mxu0 0.0
    %283 = vmatmul.mubr.f32.gmra.mxu0 %v201
    %v284 = vpop.f32.mrf.mxu0
    %v285 = vadd.f32 %v188, %v284
    %v286 = vpop.f32.mrf.mxu0
    %287 = vdwg.mxu0
    %v288 = vmax.f32 %v270, 0.0
    %v289 = vmax.f32 %v275, 0.0
    %v290 = vmax.f32 %v280, 0.0
    %v291 = vmax.f32 %v285, 0.0
    %292 = vmatprep.subr.mxu0 0.0
    %293 = vmatpush1.msra.mxu0 0.0
    %294 = vmatprep.subr.mxu0 0.0
    %295 = vmatpush1.msra.mxu0 0.0
    %296 = vmatprep.subr.mxu0 0.0
    %297 = vmatpush1.msra.mxu0 0.0
    %298 = vmatprep.subr.mxu0 0.0
    %299 = vmatpush1.msra.mxu0 0.0
    %300 = vmatprep.subr.mxu0 0.0
    %301 = vmatpush1.msra.mxu0 0.0
    %302 = vmatprep.subr.mxu0 0.0
    %303 = vmatpush1.msra.mxu0 0.0
    %304 = vmatprep.subr.mxu0 0.0
    %305 = vmatpush1.msra.mxu0 0.0
    %306 = vmatprep.subr.mxu0 0.0
    %307 = vmatpush1.msra.mxu0 0.0
    %308 = vmatprep.subr.mxu0 0.0
    %309 = vmatpush1.msra.mxu0 0.0
    %310 = vmatprep.subr.mxu0 0.0
    %311 = vmatpush1.msra.mxu0 0.0
    %312 = vmatprep.subr.mxu0 0.0
    %313 = vmatpush1.msra.mxu0 0.0
    %314 = vmatprep.subr.mxu0 0.0
    %315 = vmatpush1.msra.mxu0 0.0
    %316 = vmatprep.subr.mxu0 0.0
    %317 = vmatpush1.msra.mxu0 %v291
    %318 = vmatprep.subr.mxu0 0.0
    %319 = vmatpush1.msra.mxu0 %v290
    %320 = vmatprep.subr.mxu0 0.0
    %321 = vmatpush1.msra.mxu0 %v289
    %322 = vmatprep.subr.mxu0 0.0
    %323 = vmatpush1.msra.mxu0 %v288
    %324 = vmatprep.subr.mxu0 0.0
    %325 = vmatpush2.msra.mxu0 0.0
    %326 = vmatprep.subr.mxu0 0.0
    %327 = vmatpush2.msra.mxu0 0.0
    %328 = vmatprep.subr.mxu0 0.0
    %329 = vmatpush2.msra.mxu0 0.0
    %330 = vmatprep.subr.mxu0 0.0
    %331 = vmatpush2.msra.mxu0 0.0
    %332 = vmatprep.subr.mxu0 0.0
    %333 = vmatpush2.msra.mxu0 0.0
    %334 = vmatprep.subr.mxu0 0.0
    %335 = vmatpush2.msra.mxu0 0.0
    %336 = vmatprep.subr.mxu0 0.0
    %337 = vmatpush2.msra.mxu0 0.0
    %338 = vmatprep.subr.mxu0 0.0
    %339 = vmatpush2.msra.mxu0 0.0
    %340 = vmatprep.subr.mxu0 0.0
    %341 = vmatpush2.msra.mxu0 0.0
    %342 = vmatprep.subr.mxu0 0.0
    %343 = vmatpush2.msra.mxu0 0.0
    %344 = vmatprep.subr.mxu0 0.0
    %345 = vmatpush2.msra.mxu0 0.0
    %346 = vmatprep.subr.mxu0 0.0
    %347 = vmatpush2.msra.mxu0 0.0
    %348 = vmatprep.subr.mxu0 0.0
    %349 = vmatpush2.msra.mxu0 0.0
    %350 = vmatprep.subr.mxu0 0.0
    %351 = vmatpush2.msra.mxu0 0.0
    %352 = vmatprep.subr.mxu0 0.0
    %353 = vmatpush2.msra.mxu0 0.0
    %354 = vmatprep.subr.mxu0 0.0
    %355 = vmatpush2.msra.mxu0 0.0
    %356 = vmatprep.mubr.f32.mxu0 0.0
    %357 = vmatmul.mubr.f32.gmra.mxu0 %v192
    %v358 = vpop.f32.mrf.mxu0
    %v359 = vadd.f32 %v173, %v358
    %v360 = vpop.f32.mrf.mxu0
    %361 = vmatprep.mubr.f32.mxu0 0.0
    %362 = vmatmul.mubr.f32.gmra.mxu0 %v195
    %v363 = vpop.f32.mrf.mxu0
    %v364 = vadd.f32 %v178, %v363
    %v365 = vpop.f32.mrf.mxu0
    %366 = vmatprep.mubr.f32.mxu0 0.0
    %367 = vmatmul.mubr.f32.gmra.mxu0 %v198
    %v368 = vpop.f32.mrf.mxu0
    %v369 = vadd.f32 %v183, %v368
    %v370 = vpop.f32.mrf.mxu0
    %371 = vmatprep.mubr.f32.mxu0 0.0
    %372 = vmatmul.mubr.f32.gmra.mxu0 %v201
    %v373 = vpop.f32.mrf.mxu0
    %v374 = vadd.f32 %v188, %v373
    %v375 = vpop.f32.mrf.mxu0
    %376 = vdwg.mxu0
    %v377 = vmax.f32 %v359, 0.0
    %v378 = vmax.f32 %v364, 0.0
    %v379 = vmax.f32 %v369, 0.0
    %v380 = vmax.f32 %v374, 0.0
    %v381 = vld [vmem:[%s5] sm:$0xff]
    %v382 = vld [vmem:[%s5 + $0x8] sm:$0xff]
    %v383 = vld [vmem:[%s6] sm:$0xff]
    %v384 = vld [vmem:[%s6 + $0x8] sm:$0xff]
    %386 = vset.pattern.permute.xlu0 0
    %387 = vperm.xlu0 %386, %v383
    %v388 = vpop.permute.xlu0 %387
    %391 = vset.pattern.permute.xlu0 0
    %392 = vperm.xlu0 %391, %v384
    %v393 = vpop.permute.xlu0 %392
    %v396 = vsel %vm190, %v381, 0
    %v399 = vsel %vm190, %v382, 0
    %401 = vmatprep.subr.mxu0 0.0
    %402 = vmatpush1.msra.mxu0 0.0
    %403 = vmatprep.subr.mxu0 0.0
    %404 = vmatpush1.msra.mxu0 0.0
    %405 = vmatprep.subr.mxu0 0.0
    %406 = vmatpush1.msra.mxu0 0.0
    %407 = vmatprep.subr.mxu0 0.0
    %408 = vmatpush1.msra.mxu0 0.0
    %409 = vmatprep.subr.mxu0 0.0
    %410 = vmatpush1.msra.mxu0 0.0
    %411 = vmatprep.subr.mxu0 0.0
    %412 = vmatpush1.msra.mxu0 0.0
    %413 = vmatprep.subr.mxu0 0.0
    %414 = vmatpush1.msra.mxu0 0.0
    %415 = vmatprep.subr.mxu0 0.0
    %416 = vmatpush1.msra.mxu0 0.0
    %417 = vmatprep.subr.mxu0 0.0
    %418 = vmatpush1.msra.mxu0 0.0
    %419 = vmatprep.subr.mxu0 0.0
    %420 = vmatpush1.msra.mxu0 0.0
    %421 = vmatprep.subr.mxu0 0.0
    %422 = vmatpush1.msra.mxu0 0.0
    %423 = vmatprep.subr.mxu0 0.0
    %424 = vmatpush1.msra.mxu0 0.0
    %425 = vmatprep.subr.mxu0 0.0
    %426 = vmatpush1.msra.mxu0 %v380
    %427 = vmatprep.subr.mxu0 0.0
    %428 = vmatpush1.msra.mxu0 %v379
    %429 = vmatprep.subr.mxu0 0.0
    %430 = vmatpush1.msra.mxu0 %v378
    %431 = vmatprep.subr.mxu0 0.0
    %432 = vmatpush1.msra.mxu0 %v377
    %433 = vmatprep.subr.mxu0 0.0
    %434 = vmatpush2.msra.mxu0 0.0
    %435 = vmatprep.subr.mxu0 0.0
    %436 = vmatpush2.msra.mxu0 0.0
    %437 = vmatprep.subr.mxu0 0.0
    %438 = vmatpush2.msra.mxu0 0.0
    %439 = vmatprep.subr.mxu0 0.0
    %440 = vmatpush2.msra.mxu0 0.0
    %441 = vmatprep.subr.mxu0 0.0
    %442 = vmatpush2.msra.mxu0 0.0
    %443 = vmatprep.subr.mxu0 0.0
    %444 = vmatpush2.msra.mxu0 0.0
    %445 = vmatprep.subr.mxu0 0.0
    %446 = vmatpush2.msra.mxu0 0.0
    %447 = vmatprep.subr.mxu0 0.0
    %448 = vmatpush2.msra.mxu0 0.0
    %449 = vmatprep.subr.mxu0 0.0
    %450 = vmatpush2.msra.mxu0 0.0
    %451 = vmatprep.subr.mxu0 0.0
    %452 = vmatpush2.msra.mxu0 0.0
    %453 = vmatprep.subr.mxu0 0.0
    %454 = vmatpush2.msra.mxu0 0.0
    %455 = vmatprep.subr.mxu0 0.0
    %456 = vmatpush2.msra.mxu0 0.0
    %457 = vmatprep.subr.mxu0 0.0
    %458 = vmatpush2.msra.mxu0 0.0
    %459 = vmatprep.subr.mxu0 0.0
    %460 = vmatpush2.msra.mxu0 0.0
    %461 = vmatprep.subr.mxu0 0.0
    %462 = vmatpush2.msra.mxu0 0.0
    %463 = vmatprep.subr.mxu0 0.0
    %464 = vmatpush2.msra.mxu0 0.0
    %465 = vmatprep.mubr.f32.mxu0 0.0
    %466 = vmatmul.mubr.f32.gmra.mxu0 %v396
    %v467 = vpop.f32.mrf.mxu0
    %v468 = vadd.f32 %v388, %v467
    %v469 = vpop.f32.mrf.mxu0
    %470 = vmatprep.mubr.f32.mxu0 0.0
    %471 = vmatmul.mubr.f32.gmra.mxu0 %v399
    %v472 = vpop.f32.mrf.mxu0
    %v473 = vadd.f32 %v393, %v472
    %v474 = vpop.f32.mrf.mxu0
    %475 = vdwg.mxu0
    %476 = vst [vmem:[#allocation2] sm:$0xff] %v468
    %477 = vst [vmem:[#allocation2 + $0x8] sm:$0xff] %v473
    // Predicated region
    $region30: #{tpu_custom_call.1} parent=1 // pred_check
      _
    $region31: #{tpu_custom_call.1} parent=1 // pred_check_branch
      %479 = sbr.rel (0) target = $region33
    $region32: #{tpu_custom_call.1} parent=1 // pred_region
      %s481 = ssub.s32 256, 256
      %482 = vsyncadd [#allocation3], %s481
      %s483 = sshll.u32 [#allocation2], 4
      %s484 = int_to_ptr.vmem [resolvable:$true] %s483
      %489 = dma.vmem_to_hbm [thread:$0]  %s484, 256, %s7, [#allocation3], 128, 128, 8
    $region33: #{tpu_custom_call.1} parent=1 // pred_fallthru
      _
    // Predicated region
    $region34: #{tpu_custom_call.1} parent=1 // pred_check
      _
    $region35: #{tpu_custom_call.1} parent=1 // pred_check_branch
      %491 = sbr.rel (0) target = $region37
    $region36: #{tpu_custom_call.1} parent=1 // pred_region
      %492 = dma.done [#allocation3], 256
    $region37: #{tpu_custom_call.1} parent=1 // pred_fallthru
      _
    %493 = vsyncpa [#allocation3], 1

</llo_original>
